<compile_context>
chip_gen: v5e
topology: v5e:2x2
jax: 0.10.0
libtpu: 0.0.40
codegen_flags: <defaults>
</compile_context>

<pallas_src>
import functools

import jax
import jax.numpy as jnp
from jax.experimental import pallas as pl
from jax.experimental.pallas import tpu as pltpu


_MAX_BLOCK_BYTES = 2 * 1024 * 1024   # per-block cap: 2 MiB -> 8 MiB double-buffered (v5e-safe)
_MIN_BLOCK_BYTES = 512 * 1024        # per-block floor: amortize per-grid-step overhead
_MIN_PIPELINE_BLOCKS = 4             # target grid length for pipelining / dual-TC on v7x


def _hardtanh_kernel(x_ref, o_ref, *, min_val, max_val):
    # min_val / max_val are static Python floats -> folded as immediates.
    # Cast to the input dtype so the compare/select stays dtype-preserving.
    x = x_ref[...]
    lo = jnp.asarray(min_val, dtype=x.dtype)
    hi = jnp.asarray(max_val, dtype=x.dtype)
    o_ref[...] = jnp.clip(x, lo, hi)


def _round_up(x, m):
    return ((x + m - 1) // m) * m


def _pick_lanes(total):
    # Largest lane width (multiple of 128) dividing total -> no pad for typical
    # activation sizes.  Fall back to 128 + a tiny (<128 element) tail pad.
    for lanes in (512, 256, 128):
        if total % lanes == 0:
            return lanes
    return 128


@functools.partial(jax.jit, static_argnums=(1, 2, 3))
def _hardtanh_impl(x, min_val, max_val, donate_input):
    orig_shape = x.shape
    orig_dtype = x.dtype
    total = x.size
    itemsize = jnp.dtype(orig_dtype).itemsize

    lanes = _pick_lanes(total)
    rows = pl.cdiv(total, lanes)
    padded_total = rows * lanes

    # Byte-based block sizing (multiples of 32 rows -> sublane-packed for any dtype).
    row_bytes = lanes * itemsize
    max_block_rows = max(32, (_MAX_BLOCK_BYTES // row_bytes) // 32 * 32)
    min_block_rows = max(32, _MIN_BLOCK_BYTES // row_bytes)

    block_rows = min(rows, max_block_rows)
    grid_rows = pl.cdiv(rows, block_rows)
    if grid_rows < _MIN_PIPELINE_BLOCKS and rows >= 2 * min_block_rows:
        # Mid-size tensor: shrink blocks (but keep >= _MIN_BLOCK_BYTES) so the
        # pipeline has multiple stages and v7x can split the axis over 2 TCs.
        want = min(_MIN_PIPELINE_BLOCKS, rows // min_block_rows)
        block_rows = min(max_block_rows,
                         max(min_block_rows, _round_up(pl.cdiv(rows, want), 32)))
        grid_rows = pl.cdiv(rows, block_rows)
    # Ragged last block (rows % block_rows != 0) is masked by Pallas's
    # non-divisible-grid handling; no padding to a whole number of blocks.

    flat = x.reshape(-1)                       # free row-major bitcast under jit
    if padded_total != total:
        # Rare path (total not a multiple of 128): sub-128-element tail pad.
        flat = jnp.pad(flat, (0, padded_total - total))
    x2d = flat.reshape(rows, lanes)

    kernel = functools.partial(_hardtanh_kernel, min_val=min_val, max_val=max_val)

    out2d = pl.pallas_call(
        kernel,
        out_shape=jax.ShapeDtypeStruct((rows, lanes), orig_dtype),
        grid_spec=pltpu.PrefetchScalarGridSpec(
            num_scalar_prefetch=0,
            grid=(grid_rows,),
            in_specs=[pl.BlockSpec((block_rows, lanes), lambda i: (i, 0))],
            out_specs=pl.BlockSpec((block_rows, lanes), lambda i: (i, 0)),
        ),
        compiler_params=pltpu.CompilerParams(
            dimension_semantics=("parallel",),   # v7x: shard stream over both TCs
        ),
        cost_estimate=pl.CostEstimate(
            flops=2 * total,                     # compare + select per element
            transcendentals=0,
            bytes_accessed=2 * total * itemsize, # purely HBM-BW bound
        ),
        input_output_aliases=({0: 0} if donate_input else {}),
    )(x2d)

    out_flat = out2d.reshape(-1)
    if padded_total != total:
        out_flat = out_flat[:total]
    return out_flat.reshape(orig_shape)


def hardtanh(x, min_val, max_val, donate_input=False):
    """HardTanh forward: clamp(x, min_val, max_val). Shape/dtype preserved.

    min_val / max_val must be static Python numbers (as in nn.Hardtanh);
    passing traced values raises here on purpose.  Set donate_input=True only
    when the caller actually donates `x` (HardTanh is safe in-place).
    """
    return _hardtanh_impl(x, float(min_val), float(max_val), bool(donate_input))


if __name__ == "__main__":
    key = jax.random.PRNGKey(0)
    min_val, max_val = -1.0, 1.0

    # Primary shape from the module spec (NCHW conv-style activation).
    shapes = [
        (2, 4, 16, 16),    # small, single-block path
        (4, 8, 64, 160),   # multi-block (pipelined) path, lane-divisible
        (3, 5, 33, 17),    # ragged total -> tiny tail-pad path
    ]
    for i, shape in enumerate(shapes):
        k = jax.random.fold_in(key, i)
        x = jax.random.normal(k, shape, dtype=jnp.float32) * 3.0
        out = jax.block_until_ready(hardtanh(x, min_val, max_val))
        ref = jnp.clip(x, min_val, max_val)
        assert out.shape == x.shape and out.dtype == x.dtype
        assert jnp.allclose(out, ref), f"mismatch vs reference for shape {shape}"

    print("KERNEL_OK")
</pallas_src>

<mosaic_0001>
module attributes {stable_mosaic.version = 11 : i64} {
  func.func @_hardtanh_kernel(%arg0: i32, %arg1: memref<4x512xf32, #tpu.memory_space<vmem>>, %arg2: memref<4x512xf32, #tpu.memory_space<vmem>>) attributes {dimension_semantics = [#tpu.dimension_semantics<parallel>], iteration_bounds = array<i64: 1>, scalar_prefetch = 0 : i64, scratch_operands = 0 : i64, tpu.core_type = #tpu.core_type<tc>, window_params = [{transform_indices = @transform_0, window_bounds = array<i64: 4, 512>}, {transform_indices = @transform_1, window_bounds = array<i64: 4, 512>}]} {
    %c0 = arith.constant 0 : index
    %c0_0 = arith.constant 0 : index
    %0 = vector.load %arg1[%c0, %c0_0] : memref<4x512xf32, #tpu.memory_space<vmem>>, vector<4x512xf32>
    %cst = arith.constant -1.000000e+00 : f32
    %cst_1 = arith.constant 1.000000e+00 : f32
    %1 = vector.broadcast %cst : f32 to vector<4x512xf32>
    %2 = arith.maximumf %1, %0 : vector<4x512xf32>
    %3 = vector.broadcast %cst_1 : f32 to vector<4x512xf32>
    %4 = arith.minimumf %3, %2 : vector<4x512xf32>
    %c0_2 = arith.constant 0 : index
    %c0_3 = arith.constant 0 : index
    %5 = vector.load %arg2[%c0_2, %c0_3] : memref<4x512xf32, #tpu.memory_space<vmem>>, vector<4x512xf32>
    tpu.vector_store %arg2[%c0_2, %c0_3], %4 {strides = array<i32>} : memref<4x512xf32, #tpu.memory_space<vmem>>, vector<4x512xf32>,
    return
  }
  func.func @transform_0(%arg0: i32) -> (i32, i32) {
    %c0_i32 = arith.constant 0 : i32
    %c0_i32_0 = arith.constant 0 : i32
    return %arg0, %c0_i32 : i32, i32
  }
  func.func @transform_1(%arg0: i32) -> (i32, i32) {
    %c0_i32 = arith.constant 0 : i32
    %c0_i32_0 = arith.constant 0 : i32
    return %arg0, %c0_i32 : i32, i32
  }
}

</mosaic_0001>

<llo_original>
// kernel: _hardtanh_impl.1
$region0: #{_hardtanh_impl.1}
  #allocation0 [shape = 'u32[]', space=smem, size = 0x4, offset = 0x4, fixed_abs, tag = 'smem constant byte address 0x4 - core index']
  #allocation1 [shape = 'u32[72,128]{1,0:T(1,128)}', space=vmem, size = 0x9000, scoped, tag = 'internal scratch']
  %s0 = inlined_call_operand.vmem [shape: f32[4,512], index: 0, kind: input, shape index: {}]
  %s1 = inlined_call_operand.vmem [shape: f32[4,512], index: 1, kind: output, shape index: {}]
  %s2 = sld [smem:[#allocation0]]
  $region14: #{_hardtanh_impl.1} parent=0
    _
  %s4 = ssub.s32 1, %s2
  %s5 = scalar_select 0, %s4, %s2
  // Predicated region
  $region2: #{_hardtanh_impl.1} parent=0 // pred_check
    _
  $region3: #{_hardtanh_impl.1} parent=0 // pred_check_branch
    %7 = sbr.rel (0) target = $region5
  $region4: #{_hardtanh_impl.1} parent=0 // pred_region
    _
  $region5: #{_hardtanh_impl.1} parent=0 // pred_fallthru
    _
  %v8 = vld [vmem:[%s0] sm:$0xff]
  %v9 = vld [vmem:[%s0 + $0x8] sm:$0xff]
  %v10 = vmax.f32 %v8, -1.0
  %v11 = vmax.f32 %v9, -1.0
  %v12 = vmin.f32 %v10, 1.0
  %v13 = vmin.f32 %v11, 1.0
  %14 = vst [vmem:[%s1] sm:$0xff] %v12
  %15 = vst [vmem:[%s1 + $0x8] sm:$0xff] %v13
  // Predicated region
  $region6: #{_hardtanh_impl.1} parent=0 // pred_check
    _
  $region7: #{_hardtanh_impl.1} parent=0 // pred_check_branch
    %17 = sbr.rel (0) target = $region9
  $region8: #{_hardtanh_impl.1} parent=0 // pred_region
    _
  $region9: #{_hardtanh_impl.1} parent=0 // pred_fallthru
    _
  // Predicated region
  $region10: #{_hardtanh_impl.1} parent=0 // pred_check
    _
  $region11: #{_hardtanh_impl.1} parent=0 // pred_check_branch
    %19 = sbr.rel (0) target = $region13
  $region12: #{_hardtanh_impl.1} parent=0 // pred_region
    _
  $region13: #{_hardtanh_impl.1} parent=0 // pred_fallthru
    _

</llo_original>
